<compile_context>
chip_gen: v5e
topology: v5e:2x2
jax: 0.10.0
libtpu: 0.0.40
codegen_flags: <defaults>
</compile_context>

<pallas_src>
import jax
import jax.numpy as jnp
from jax import lax
from jax.experimental import pallas as pl
from jax.experimental.pallas import tpu as pltpu


def _cdiv(a, b):
    return -(-a // b)


def _gem_kernel_factory(eps: float, hw: int, thw: int, needs_mask: bool):
    inv_hw = 1.0 / float(hw)

    def gem_kernel(p_col_ref, inv_p_ref, x_ref, o_ref, acc_ref):
        # x_ref:     (TB, TC, THW) -- C on sublanes, HW on lanes
        # p_col_ref: (TC, 1)       -- per-channel exponent p
        # inv_p_ref: (1, TC)       -- 1/p (host precomputed)
        # o_ref:     (TB, 1, TC)
        # acc_ref:   (TB, TC) f32 scratch, persistent across the HW grid axis
        h = pl.program_id(2)

        @pl.when(h == 0)
        def _init():
            acc_ref[...] = jnp.zeros_like(acc_ref)

        x = x_ref[...].astype(jnp.float32)            # (TB, TC, THW)
        p_col = p_col_ref[...].astype(jnp.float32)    # (TC, 1)

        x = jnp.maximum(x, eps)                       # clamp(min=eps), eps > 0
        # x^p with p broadcast over the lane (HW) axis; exp/log go to the EUP.
        xp = jnp.exp(p_col[None, :, :] * jnp.log(x))  # (TB, TC, THW)

        if needs_mask:
            # Only compiled when HW is tiled with an uneven last tile.
            lane = lax.broadcasted_iota(jnp.int32, xp.shape, 2)
            xp = jnp.where(lane + h * thw < hw, xp, 0.0)

        acc_ref[...] += jnp.sum(xp, axis=2)           # (TB, TC)

        @pl.when(h == pl.num_programs(2) - 1)
        def _finalize():
            inv_p = inv_p_ref[...].astype(jnp.float32)   # (1, TC)
            m = acc_ref[...] * inv_hw                    # mean over H*W
            out = jnp.exp(jnp.log(m) * inv_p)            # m^(1/p)
            o_ref[...] = out[:, None, :].astype(o_ref.dtype)

    return gem_kernel


def _select_tiles(B, C, HW, itemsize):
    """Per-generation, budget-driven tile selection."""
    try:
        info = pltpu.get_tpu_info()
        vmem_cap = int(getattr(info, "vmem_capacity_bytes", 64 << 20))
    except Exception:  # pragma: no cover - conservative fallback
        vmem_cap = 64 << 20

    if vmem_cap >= (100 << 20):      # v5e / v6e: 128 MiB physical VMEM
        x_budget_db = 32 << 20       # double-buffered x footprint budget
        vmem_limit = 64 << 20
        tc_cap = 512
    else:                            # v7x: 64 MiB physical VMEM per TC
        x_budget_db = 24 << 20
        vmem_limit = 48 << 20
        tc_cap = 256
    per_tile = x_budget_db // 2

    # Channel tile: full C when it fits; otherwise a 128-multiple (legal on
    # both the x sublane axis and the output lane axis).
    tc = C if C <= tc_cap else tc_cap

    # HW tile: prefer the full row (no padded lanes -> no masked EUP work);
    # otherwise a 128-multiple chosen to minimize padding.
    row_bytes = tc * HW * itemsize
    if row_bytes <= per_tile:
        thw = HW
    else:
        max_thw = max(128, (per_tile // (tc * itemsize)) // 128 * 128)
        n_min = max(2, _cdiv(HW, max_thw))
        best_t, best_pad = 128, None
        for n in range(n_min, n_min + 9):
            t = min(max_thw, 128 * _cdiv(HW, 128 * n))
            pad = _cdiv(HW, t) * t - HW
            if best_pad is None or pad < best_pad:
                best_t, best_pad = t, pad
            if pad == 0:
                break
        thw = best_t

    # Batch blocking proportional to the remaining budget (no hard cliff).
    tb = max(1, min(B, per_tile // max(1, tc * thw * itemsize)))

    # Keep >= 2 tiles on the parallel (b, c) axes so v7x's 2nd TC has work.
    if _cdiv(B, tb) * _cdiv(C, tc) == 1:
        if B >= 2:
            tb = max(1, B // 2)
        elif C >= 256:
            tc = max(128, ((C // 2) // 128) * 128)

    return tb, tc, thw, vmem_limit


def gem_pooling(x_nchw, p, *, eps=1e-6, normalize=False):
    """x_nchw: (B, C, H, W); p: (C,) per-channel exponent.

    Returns (B, C), matching GeMPooling.forward with output_size=(1, 1)."""
    assert eps > 0, "eps must be > 0 (keeps log() finite inside the kernel)"
    B, C, H, W = x_nchw.shape
    HW = H * W

    # Free contiguous reshape of NCHW (no transpose, no extra HBM pass).
    x = x_nchw.reshape(B, C, HW)
    p_col = p.reshape(C, 1).astype(jnp.float32)
    inv_p = (1.0 / p.astype(jnp.float32)).reshape(1, C)

    itemsize = jnp.dtype(x.dtype).itemsize
    tb, tc, thw, vmem_limit = _select_tiles(B, C, HW, itemsize)
    needs_mask = (HW % thw) != 0
    grid = (_cdiv(B, tb), _cdiv(C, tc), _cdiv(HW, thw))

    kernel = _gem_kernel_factory(float(eps), HW, thw, needs_mask)

    out3 = pl.pallas_call(
        kernel,
        out_shape=jax.ShapeDtypeStruct((B, 1, C), x_nchw.dtype),
        grid_spec=pltpu.PrefetchScalarGridSpec(
            num_scalar_prefetch=0,
            grid=grid,
            in_specs=[
                pl.BlockSpec((tc, 1), lambda b, c, h: (c, 0)),           # p col
                pl.BlockSpec((1, tc), lambda b, c, h: (0, c)),           # 1/p
                pl.BlockSpec((tb, tc, thw), lambda b, c, h: (b, c, h)),  # x
            ],
            out_specs=pl.BlockSpec((tb, 1, tc), lambda b, c, h: (b, 0, c)),
            scratch_shapes=[pltpu.VMEM((tb, tc), jnp.float32)],
        ),
        compiler_params=pltpu.CompilerParams(
            dimension_semantics=("parallel", "parallel", "arbitrary"),
            vmem_limit_bytes=vmem_limit,
        ),
    )(p_col, inv_p, x)

    out = out3.reshape(B, C)
    if normalize:
        # F.normalize(dim=-1, p=2, eps=1e-12) on the tiny (B, C) result in
        # plain JAX, so the kernel never needs the whole channel row per tile.
        o32 = out.astype(jnp.float32)
        nrm = jnp.sqrt(jnp.sum(o32 * o32, axis=-1, keepdims=True))
        out = (o32 / jnp.maximum(nrm, 1e-12)).astype(out.dtype)
    return out


def gem_pooling_ref(x_nchw, p, *, eps=1e-6, normalize=False):
    """Pure-JAX reference mirroring the PyTorch forward."""
    x = jnp.maximum(x_nchw.astype(jnp.float32), eps)
    x = jnp.transpose(x, (0, 2, 3, 1))              # NHWC
    x = jnp.power(x, p)                             # broadcast over channel
    x = jnp.transpose(x, (0, 3, 1, 2))              # NCHW
    x = jnp.mean(x, axis=(2, 3))                    # adaptive avg pool (1,1)
    x = jnp.power(x, 1.0 / p)
    if normalize:
        nrm = jnp.linalg.norm(x, axis=-1, keepdims=True)
        x = x / jnp.maximum(nrm, 1e-12)             # F.normalize eps=1e-12
    return x


if __name__ == "__main__":
    key = jax.random.PRNGKey(0)
    init_norm = 3.0

    # (B, C, H, W) configs: the small spec shape, plus ones that exercise the
    # full-HW (mask-free) blocks and the channel-tiled / megacore-split paths.
    configs = [
        (2, 4, 16, 16),      # tiny head; batch split for >=2 parallel tiles
        (2, 8, 48, 48),      # HW = 2304 in a single mask-free full-dim block
        (1, 384, 8, 8),      # channel-tiled path (partial last C block)
    ]

    for (B, C, H, W) in configs:
        kx, key = jax.random.split(key)
        x = jax.random.uniform(kx, (B, C, H, W), dtype=jnp.float32,
                               minval=0.0, maxval=2.0)
        p = jnp.full((C,), init_norm, dtype=jnp.float32)

        for normalize in (False, True):
            out = gem_pooling(x, p, eps=1e-6, normalize=normalize)
            out = jax.block_until_ready(out)
            ref = gem_pooling_ref(x, p, eps=1e-6, normalize=normalize)
            assert out.shape == (B, C), (out.shape, (B, C))
            assert jnp.allclose(out, ref, rtol=1e-4, atol=1e-5), (
                (B, C, H, W), normalize, out, ref)

    print("KERNEL_OK")
</pallas_src>

<mosaic_0001>
module attributes {stable_mosaic.version = 11 : i64} {
  func.func @gem_kernel(%arg0: i32, %arg1: i32, %arg2: i32, %arg3: memref<4x1xf32, #tpu.memory_space<vmem>>, %arg4: memref<1x4xf32, #tpu.memory_space<vmem>>, %arg5: memref<1x4x256xf32, #tpu.memory_space<vmem>>, %arg6: memref<1x1x4xf32, #tpu.memory_space<vmem>>, %arg7: memref<1x4xf32, #tpu.memory_space<vmem>>) attributes {dimension_semantics = [#tpu.dimension_semantics<parallel>, #tpu.dimension_semantics<parallel>, #tpu.dimension_semantics<arbitrary>], iteration_bounds = array<i64: 2, 1, 1>, scalar_prefetch = 0 : i64, scratch_operands = 1 : i64, tpu.core_type = #tpu.core_type<tc>, window_params = [{transform_indices = @transform_0, window_bounds = array<i64: 4, 1>}, {transform_indices = @transform_1, window_bounds = array<i64: 1, 4>}, {transform_indices = @transform_2, window_bounds = array<i64: 1, 4, 256>}, {transform_indices = @transform_3, window_bounds = array<i64: 1, 1, 4>}]} {
    %c0_i32 = arith.constant 0 : i32
    %0 = arith.cmpi eq, %arg2, %c0_i32 : i32
    %1 = arith.extui %0 : i1 to i32
    %c0_i32_0 = arith.constant 0 : i32
    %2 = arith.cmpi ne, %1, %c0_i32_0 : i32
    scf.if %2 {
      %cst_12 = arith.constant 0.000000e+00 : f32
      %19 = vector.broadcast %cst_12 : f32 to vector<1x4xf32>
      %c0_13 = arith.constant 0 : index
      %c0_14 = arith.constant 0 : index
      %20 = vector.load %arg7[%c0_13, %c0_14] : memref<1x4xf32, #tpu.memory_space<vmem>>, vector<1x4xf32>
      tpu.vector_store %arg7[%c0_13, %c0_14], %19 {strides = array<i32>} : memref<1x4xf32, #tpu.memory_space<vmem>>, vector<1x4xf32>,
    } else {
    }
    %c0 = arith.constant 0 : index
    %c0_1 = arith.constant 0 : index
    %c0_2 = arith.constant 0 : index
    %3 = vector.load %arg5[%c0, %c0_1, %c0_2] : memref<1x4x256xf32, #tpu.memory_space<vmem>>, vector<1x4x256xf32>
    %c0_3 = arith.constant 0 : index
    %c0_4 = arith.constant 0 : index
    %4 = vector.load %arg3[%c0_3, %c0_4] : memref<4x1xf32, #tpu.memory_space<vmem>>, vector<4x1xf32>
    %cst = arith.constant 9.99999997E-7 : f32
    %5 = vector.broadcast %cst : f32 to vector<1x4x256xf32>
    %6 = arith.maximumf %3, %5 : vector<1x4x256xf32>
    %7 = vector.shape_cast %4 : vector<4x1xf32> to vector<1x4x1xf32>
    %8 = math.log %6 : vector<1x4x256xf32>
    %9 = vector.broadcast %7 : vector<1x4x1xf32> to vector<1x4x256xf32>
    %10 = arith.mulf %9, %8 : vector<1x4x256xf32>
    %11 = math.exp %10 : vector<1x4x256xf32>
    %c0_5 = arith.constant 0 : index
    %c0_6 = arith.constant 0 : index
    %12 = vector.load %arg7[%c0_5, %c0_6] : memref<1x4xf32, #tpu.memory_space<vmem>>, vector<1x4xf32>
    %cst_7 = arith.constant dense<0.000000e+00> : vector<1x4xf32>
    %13 = vector.multi_reduction <add>, %11, %cst_7 [2] : vector<1x4x256xf32> to vector<1x4xf32>
    %14 = arith.addf %12, %13 : vector<1x4xf32>
    %c0_8 = arith.constant 0 : index
    %c0_9 = arith.constant 0 : index
    %15 = vector.load %arg7[%c0_8, %c0_9] : memref<1x4xf32, #tpu.memory_space<vmem>>, vector<1x4xf32>
    tpu.vector_store %arg7[%c0_8, %c0_9], %14 {strides = array<i32>} : memref<1x4xf32, #tpu.memory_space<vmem>>, vector<1x4xf32>,
    %c0_i32_10 = arith.constant 0 : i32
    %16 = arith.cmpi eq, %arg2, %c0_i32_10 : i32
    %17 = arith.extui %16 : i1 to i32
    %c0_i32_11 = arith.constant 0 : i32
    %18 = arith.cmpi ne, %17, %c0_i32_11 : i32
    scf.if %18 {
      %c0_12 = arith.constant 0 : index
      %c0_13 = arith.constant 0 : index
      %19 = vector.load %arg4[%c0_12, %c0_13] : memref<1x4xf32, #tpu.memory_space<vmem>>, vector<1x4xf32>
      %c0_14 = arith.constant 0 : index
      %c0_15 = arith.constant 0 : index
      %20 = vector.load %arg7[%c0_14, %c0_15] : memref<1x4xf32, #tpu.memory_space<vmem>>, vector<1x4xf32>
      %cst_16 = arith.constant 3.906250e-03 : f32
      %21 = vector.broadcast %cst_16 : f32 to vector<1x4xf32>
      %22 = arith.mulf %20, %21 : vector<1x4xf32>
      %23 = math.log %22 : vector<1x4xf32>
      %24 = arith.mulf %23, %19 : vector<1x4xf32>
      %25 = math.exp %24 : vector<1x4xf32>
      %26 = vector.shape_cast %25 : vector<1x4xf32> to vector<1x1x4xf32>
      %c0_17 = arith.constant 0 : index
      %c0_18 = arith.constant 0 : index
      %c0_19 = arith.constant 0 : index
      %27 = vector.load %arg6[%c0_17, %c0_18, %c0_19] : memref<1x1x4xf32, #tpu.memory_space<vmem>>, vector<1x1x4xf32>
      tpu.vector_store %arg6[%c0_17, %c0_18, %c0_19], %26 {strides = array<i32>} : memref<1x1x4xf32, #tpu.memory_space<vmem>>, vector<1x1x4xf32>,
    } else {
    }
    return
  }
  func.func @transform_0(%arg0: i32, %arg1: i32, %arg2: i32) -> (i32, i32) {
    %c0_i32 = arith.constant 0 : i32
    %c0_i32_0 = arith.constant 0 : i32
    return %arg1, %c0_i32 : i32, i32
  }
  func.func @transform_1(%arg0: i32, %arg1: i32, %arg2: i32) -> (i32, i32) {
    %c0_i32 = arith.constant 0 : i32
    %c0_i32_0 = arith.constant 0 : i32
    return %c0_i32, %arg1 : i32, i32
  }
  func.func @transform_2(%arg0: i32, %arg1: i32, %arg2: i32) -> (i32, i32, i32) {
    %c0_i32 = arith.constant 0 : i32
    return %arg0, %arg1, %arg2 : i32, i32, i32
  }
  func.func @transform_3(%arg0: i32, %arg1: i32, %arg2: i32) -> (i32, i32, i32) {
    %c0_i32 = arith.constant 0 : i32
    %c0_i32_0 = arith.constant 0 : i32
    return %arg0, %c0_i32, %arg1 : i32, i32, i32
  }
}

</mosaic_0001>

<llo_original>
// kernel: tpu_custom_call.1
$region0: #{tpu_custom_call.1}
  #allocation0 [shape = 'u32[]', space=smem, size = 0x4, offset = 0x4, fixed_abs, tag = 'smem constant byte address 0x4 - core index']
  #allocation1 [shape = 'u32[72,128]{1,0:T(1,128)}', space=vmem, size = 0x9000, scoped, tag = 'internal scratch']
  #allocation2 [shape = 'f32[1,4]{1,0:T(1,128)}', space=vmem, size = 0x200, scoped, tag = 'scratch operand']
  %s0 = inlined_call_operand.vmem [shape: f32[4,1], index: 0, kind: input, shape index: {}]
  %s1 = inlined_call_operand.vmem [shape: f32[1,4], index: 1, kind: input, shape index: {}]
  %s2 = inlined_call_operand.hbm [shape: f32[2,4,256], index: 2, kind: input, shape index: {}]
  %s3 = inlined_call_operand.hbm [shape: f32[2,1,4], index: 3, kind: output, shape index: {}]
  %s4 = sld [smem:[#allocation0]]
  $region57: #{tpu_custom_call.1} parent=0
    _
  %s6 = ssub.s32 1, %s4
  %s7 = scalar_select 0, %s6, %s4
  $region1: #{tpu_custom_call.1} parent=0
    #allocation3 [shape = 'u8[8192]{0}', space=vmem, size = 0x2000, scoped, tag = 'input window, operand 2']
    #allocation4 [shape = 's32[2]{0}', space=sflag, size = 0x8, scoped, tag = 'scoped memory for tpu_custom_call.1']
    #allocation5 [shape = 's32[2]{0}', space=sflag, size = 0x8, scoped, tag = 'scoped memory for tpu_custom_call.1']
    #allocation6 [shape = 'u8[1024]{0}', space=vmem, size = 0x400, scoped, tag = 'output window, operand 0']
    %8 = vsyncpa [#allocation4], 0
    %s9 = scalar_lea.sflag [#allocation4], 1
    %10 = vsyncpa %s9, 0
    %11 = vsyncpa [#allocation5], 0
    %s12 = scalar_lea.sflag [#allocation5], 1
    %13 = vsyncpa %s12, 0
    loop: start=0, step=1, limit=4
    $region2: #{tpu_custom_call.1} parent=1 // loop_pre_header
      _
    $region3: #{tpu_custom_call.1} parent=1 // loop_header
      %s15 = sphi 0, %s19
      %p16 = scmp.ge.s32.totalorder %s15, 4
      %s22 = sphi 0, %s41
      %s23 = sphi 0, %s37
      %s24 = sphi 0, %s33
      %s25 = sphi 0, %s22
      %s26 = sphi 0, %s23
      %s27 = sphi 0, %s24
      %s28 = sphi 0, %s25
      %s29 = sphi 0, %s26
      %s30 = sphi 0, %s27
      %s44 = sphi 0, %s46
      %s47 = sphi 0, %s44
      %s48 = sphi 0, %s47
      %s64 = sphi 0, %s48
      %s70 = sphi 0, %s72
      %s73 = sphi 0, %s70
      %s74 = sphi 0, %s73
      %s90 = sphi 0, %s74
      %s100 = sphi 0, %s102
      %s103 = sphi 0, %s100
      %s104 = sphi 0, %s103
      %s120 = sphi 0, %s104
      %s128 = sphi 0, %s130
      %s131 = sphi 0, %s128
      %s132 = sphi 0, %s131
      %s148 = sphi 0, %s132
    $region4: #{tpu_custom_call.1} parent=1 // loop_header_branch
      %18 = sbr.rel (%p16) target = $region8
    $region5: #{tpu_custom_call.1} parent=1 // loop_body
      %s20 = ssub.s32 %s15, 1
      %s21 = ssub.s32 %s15, 2
      %s31 = sadd.s32 1, %s24
      %p32 = scmp.ge.s32.totalorder %s31, 1
      %s33 = scalar_select %p32, 0, %s31
      %s34 = sadd.s32 1, %s23
      %s35 = scalar_select %p32, %s34, %s23
      %p36 = scmp.ge.s32.totalorder %s35, 1
      %s37 = scalar_select %p36, 0, %s35
      %s38 = sadd.s32 1, %s22
      %s39 = scalar_select %p36, %s38, %s22
      %p40 = scmp.ge.s32.totalorder %s39, 2
      %s41 = scalar_select %p40, 0, %s39
      %s42 = ssub.s32 %s23, %s37
      %p43 = scmp.eq.s32.totalorder %s42, 0
      %s45 = sadd.s32 %s44, 1
      %s46 = scalar_select %p43, %s44, %s45
      %p49 = pneg %p43
      %p50 = scmp.eq.s32.totalorder %s15, 1
      %p51 = por %p49, %p50
      %p52 = scmp.ne.s32.totalorder %s44, %s47
      %p53 = scmp.eq.s32.totalorder %s15, 0
      %p54 = por %p52, %p53
      %p55 = scmp.ne.s32.totalorder %s44, %s47
      %p56 = scmp.eq.s32.totalorder %s20, 1
      %p57 = por %p55, %p56
      %p58 = scmp.ne.s32.totalorder %s47, %s48
      %p59 = scmp.eq.s32.totalorder %s20, 0
      %p60 = por %p58, %p59
      %p61 = scmp.ne.s32.totalorder %s47, %s48
      %p62 = scmp.eq.s32.totalorder %s21, 1
      %p63 = por %p61, %p62
      %p65 = scmp.ne.s32.totalorder %s48, %s64
      %p66 = scmp.eq.s32.totalorder %s21, 0
      %p67 = por %p65, %p66
      %s68 = ssub.s32 %s23, %s37
      %p69 = scmp.eq.s32.totalorder %s68, 0
      %s71 = sadd.s32 %s70, 1
      %s72 = scalar_select %p69, %s70, %s71
      %p75 = pneg %p69
      %p76 = scmp.eq.s32.totalorder %s15, 1
      %p77 = por %p75, %p76
      %p78 = scmp.ne.s32.totalorder %s70, %s73
      %p79 = scmp.eq.s32.totalorder %s15, 0
      %p80 = por %p78, %p79
      %p81 = scmp.ne.s32.totalorder %s70, %s73
      %p82 = scmp.eq.s32.totalorder %s20, 1
      %p83 = por %p81, %p82
      %p84 = scmp.ne.s32.totalorder %s73, %s74
      %p85 = scmp.eq.s32.totalorder %s20, 0
      %p86 = por %p84, %p85
      %p87 = scmp.ne.s32.totalorder %s73, %s74
      %p88 = scmp.eq.s32.totalorder %s21, 1
      %p89 = por %p87, %p88
      %p91 = scmp.ne.s32.totalorder %s74, %s90
      %p92 = scmp.eq.s32.totalorder %s21, 0
      %p93 = por %p91, %p92
      %s94 = ssub.s32 %s22, %s41
      %s95 = ssub.s32 %s23, %s37
      %s96 = sor.u32 %s94, %s95
      %s97 = ssub.s32 %s24, %s33
      %s98 = sor.u32 %s96, %s97
      %p99 = scmp.eq.s32.totalorder %s98, 0
      %s101 = sadd.s32 %s100, 1
      %s102 = scalar_select %p99, %s100, %s101
      %p105 = pneg %p99
      %p106 = scmp.eq.s32.totalorder %s15, 1
      %p107 = por %p105, %p106
      %p108 = scmp.ne.s32.totalorder %s100, %s103
      %p109 = scmp.eq.s32.totalorder %s15, 0
      %p110 = por %p108, %p109
      %p111 = scmp.ne.s32.totalorder %s100, %s103
      %p112 = scmp.eq.s32.totalorder %s20, 1
      %p113 = por %p111, %p112
      %p114 = scmp.ne.s32.totalorder %s103, %s104
      %p115 = scmp.eq.s32.totalorder %s20, 0
      %p116 = por %p114, %p115
      %p117 = scmp.ne.s32.totalorder %s103, %s104
      %p118 = scmp.eq.s32.totalorder %s21, 1
      %p119 = por %p117, %p118
      %p121 = scmp.ne.s32.totalorder %s104, %s120
      %p122 = scmp.eq.s32.totalorder %s21, 0
      %p123 = por %p121, %p122
      %s124 = ssub.s32 %s22, %s41
      %s125 = ssub.s32 %s23, %s37
      %s126 = sor.u32 %s124, %s125
      %p127 = scmp.eq.s32.totalorder %s126, 0
      %s129 = sadd.s32 %s128, 1
      %s130 = scalar_select %p127, %s128, %s129
      %p133 = pneg %p127
      %p134 = scmp.eq.s32.totalorder %s15, 1
      %p135 = por %p133, %p134
      %p136 = scmp.ne.s32.totalorder %s128, %s131
      %p137 = scmp.eq.s32.totalorder %s15, 0
      %p138 = por %p136, %p137
      %p139 = scmp.ne.s32.totalorder %s128, %s131
      %p140 = scmp.eq.s32.totalorder %s20, 1
      %p141 = por %p139, %p140
      %p142 = scmp.ne.s32.totalorder %s131, %s132
      %p143 = scmp.eq.s32.totalorder %s20, 0
      %p144 = por %p142, %p143
      %p145 = scmp.ne.s32.totalorder %s131, %s132
      %p146 = scmp.eq.s32.totalorder %s21, 1
      %p147 = por %p145, %p146
      %p149 = scmp.ne.s32.totalorder %s132, %s148
      %p150 = scmp.eq.s32.totalorder %s21, 0
      %p151 = por %p149, %p150
      %p152 = scmp.le.s32.totalorder 1, %s15
      %p153 = scmp.lt.s32.totalorder %s15, 3
      %p154 = pnand %p152, %p153
      %p155 = pneg %p154
      // Predicated region
      $region9: #{tpu_custom_call.1} parent=5 // pred_check
        _
      $region10: #{tpu_custom_call.1} parent=5 // pred_check_branch
        %157 = sbr.rel (%p154) target = $region12
      $region11: #{tpu_custom_call.1} parent=5 // pred_region
        %s158 = ssub.s32 %s15, 1
        // Predicated region
        $region13: #{tpu_custom_call.1} parent=11 // pred_check
          %p159 = pneg %p60
        $region14: #{tpu_custom_call.1} parent=11 // pred_check_branch
          %161 = sbr.rel (%p159) target = $region16
        $region15: #{tpu_custom_call.1} parent=11 // pred_region
          %p162 = scmp.lt.s32.totalorder %s26, 0
          %s163 = scalar_select %p162, %s26, 0
          %s164 = smul.addr %s163, 4
          %s165 = scalar_lea.vmem %s0, %s164
        $region16: #{tpu_custom_call.1} parent=11 // pred_fallthru
          _
        // Predicated region
        $region17: #{tpu_custom_call.1} parent=11 // pred_check
          %p166 = pneg %p86
        $region18: #{tpu_custom_call.1} parent=11 // pred_check_branch
          %168 = sbr.rel (%p166) target = $region20
        $region19: #{tpu_custom_call.1} parent=11 // pred_region
          %p169 = scmp.lt.s32.totalorder %s26, 0
          %s170 = scalar_select %p169, %s26, 0
          %s171 = scalar_lea.vmem %s1, %s170
        $region20: #{tpu_custom_call.1} parent=11 // pred_fallthru
          _
      $region12: #{tpu_custom_call.1} parent=5 // pred_fallthru
        _
      %p172 = scmp.lt.s32.totalorder %s15, 2
      // Predicated region
      $region21: #{tpu_custom_call.1} parent=5 // pred_check
        %p173 = pneg %p172
      $region22: #{tpu_custom_call.1} parent=5 // pred_check_branch
        %175 = sbr.rel (%p173) target = $region24
      $region23: #{tpu_custom_call.1} parent=5 // pred_region
        // Predicated region
        $region25: #{tpu_custom_call.1} parent=23 // pred_check
          %p176 = pneg %p110
        $region26: #{tpu_custom_call.1} parent=23 // pred_check_branch
          %178 = sbr.rel (%p176) target = $region28
        $region27: #{tpu_custom_call.1} parent=23 // pred_region
          %s179 = sand.u32 %s100, 1
          %s180 = scalar_lea.sflag [#allocation4], %s179
          %s181 = sand.u32 %s100, 1
          %s182 = smul.addr %s181, 8
          %s183 = scalar_lea.vmem [#allocation3], %s182
          %s184 = smul.u32 2, %s24
          %186 = vsyncadd %s180, 0
          %s187 = smul.addr %s23, 2
          %s188 = sadd.s32 %s184, %s187
          %s189 = smul.addr %s22, 2
          %s190 = sadd.s32 %s188, %s189
          %s191 = smul.addr %s190, 4
          %s192 = scalar_lea.hbm %s2, %s191
          %s194 = sshll.u32 %s192, 4
          %s195 = int_to_ptr.hbm [resolvable:$true] %s194
          %s196 = sshll.u32 %s183, 4
          %s197 = int_to_ptr.vmem [resolvable:$true] %s196
          %199 = dma.hbm_to_vmem [thread:$0]  %s195, 128, %s197, %s180
        $region28: #{tpu_custom_call.1} parent=23 // pred_fallthru
          _
      $region24: #{tpu_custom_call.1} parent=5 // pred_fallthru
        _
      %p200 = scmp.le.s32.totalorder 1, %s15
      %p201 = scmp.lt.s32.totalorder %s15, 3
      %p202 = pnand %p200, %p201
      %p203 = pneg %p202
      // Predicated region
      $region29: #{tpu_custom_call.1} parent=5 // pred_check
        _
      $region30: #{tpu_custom_call.1} parent=5 // pred_check_branch
        %205 = sbr.rel (%p202) target = $region32
      $region31: #{tpu_custom_call.1} parent=5 // pred_region
        %s206 = ssub.s32 %s15, 1
        %s207 = sand.u32 %s103, 1
        %s208 = scalar_lea.sflag [#allocation4], %s207
        %s209 = sand.u32 %s103, 1
        %s210 = smul.addr %s209, 8
        %s211 = scalar_lea.vmem [#allocation3], %s210
        // Predicated region
        $region33: #{tpu_custom_call.1} parent=31 // pred_check
          %p212 = pneg %p116
        $region34: #{tpu_custom_call.1} parent=31 // pred_check_branch
          %214 = sbr.rel (%p212) target = $region36
        $region35: #{tpu_custom_call.1} parent=31 // pred_region
          %216 = dma.done %s208, 128
        $region36: #{tpu_custom_call.1} parent=31 // pred_fallthru
          _
        %p217 = scmp.lt.s32.totalorder %s26, 0
        %s218 = scalar_select %p217, %s26, 0
        %s219 = smul.addr %s218, 4
        %s220 = scalar_lea.vmem %s0, %s219
        %p221 = pneg %p60
        %p222 = pneg %p57
        %p223 = scmp.lt.s32.totalorder %s26, 0
        %s224 = scalar_select %p223, %s26, 0
        %s225 = scalar_lea.vmem %s1, %s224
        %p226 = pneg %p86
        %p227 = pneg %p83
        %s228 = sand.u32 %s103, 1
        %s229 = scalar_lea.sflag [#allocation4], %s228
        %s230 = sand.u32 %s103, 1
        %s231 = smul.addr %s230, 8
        %s232 = scalar_lea.vmem [#allocation3], %s231
        %p233 = pneg %p116
        %p234 = pneg %p113
        %p235 = pneg %p144
        %p236 = pneg %p141
        %s237 = sand.u32 %s131, 1
        %s238 = scalar_lea.sflag [#allocation5], %s237
        %s239 = sand.u32 %s131, 1
        %s240 = scalar_lea.vmem [#allocation6], %s239
        %p241 = scmp.lt.s32.totalorder %s26, 0
        %s242 = scalar_select %p241, %s26, 0
        %s243 = smul.addr %s242, 4
        %s244 = scalar_lea.vmem %s0, %s243
        %p245 = scmp.lt.s32.totalorder %s26, 0
        %s246 = scalar_select %p245, %s26, 0
        %s247 = scalar_lea.vmem %s1, %s246
        %s248 = smul.u32 2, %s27
        %p249 = scmp.eq.s32.totalorder %s27, 0
        // Predicated region
        $region37: #{tpu_custom_call.1} parent=31 // pred_check
          %p250 = pneg %p249
        $region38: #{tpu_custom_call.1} parent=31 // pred_check_branch
          %252 = sbr.rel (%p250) target = $region40
        $region39: #{tpu_custom_call.1} parent=31 // pred_region
          %vm253 = vcmask 24576
          %254 = vst.msk [vmem:[#allocation2] sm:$0x1] %vm253, 0.0
        $region40: #{tpu_custom_call.1} parent=31 // pred_fallthru
          _
        %v255 = vld [vmem:[%s211] sm:$0xff]
        %v256 = vld [vmem:[%s244] sm:$0xf]
        %v257 = vmax.f32 %v255, 1e-06
        %v258 = vlog2.pop %v257
        %v259 = vmul.f32 %v258, 0.6931472
        %261 = vset.pattern.permute.xlu0 0
        %262 = vperm.xlu0 %261, %v256
        %v263 = vpop.permute.xlu0 %262
        %266 = vst [vmem:[#allocation1] ss:$2 sm:$0xff] %v259
        %v267 = vld.sshfl [vmem:[#allocation1] sm:$0xff pattern:$0x75316420]
        %v268 = vld.sshfl [vmem:[#allocation1 + $0x8] sm:$0xff pattern:$0x75316420]
        %v271 = vmul.f32 %v263, %v267
        %v272 = vmul.f32 %v263, %v268
        %v273 = vmul.f32 %v271, 1.442695
        %v274 = vpow.pop %v273
        %v275 = vmul.f32 %v272, 1.442695
        %v276 = vpow.pop %v275
        %v277 = vld [vmem:[#allocation2] sm:$0x1]
        %vm278 = vcmask 1043456
        %v279 = vsel %vm278, %v274, 0.0
        %v280 = vsel %vm278, %v276, 0.0
        %v281 = vadd.f32 %v279, %v280
        %282 = vadd.xlane.f32.xlu0 %v281
        %v283 = vpop.xlane.xlu0 %282
        %v285 = vperm.slane %v283, 0
        %v286 = vperm.slane %v283, 1
        %v287 = vperm.slane %v283, 2
        %v288 = vperm.slane %v283, 3
        %289 = vst [vmem:[#allocation1] ss:$9 sm:$0xff] %v285
        %s290 = scalar_lea.vmem [#allocation1], 1
        %291 = vst [vmem:[%s290] ss:$9 sm:$0xff] %v286
        %s292 = scalar_lea.vmem [#allocation1], 2
        %293 = vst [vmem:[%s292] ss:$9 sm:$0xff] %v287
        %s294 = scalar_lea.vmem [#allocation1], 3
        %295 = vst [vmem:[%s294] ss:$9 sm:$0xff] %v288
        %v296 = vld [vmem:[#allocation1] sm:$0xff]
        %297 = vset.pattern.permute.xlu0 0
        %298 = vperm.xlu0 %297, %v296
        %v299 = vpop.permute.xlu0 %298
        %v300 = vlaneseq
        %v301 = vand.u32 %v300, 127
        %v302 = vperm.slane %v299, %v301
        %v304 = vadd.f32 %v277, %v302
        %vm305 = vcmask 24576
        %306 = vst.msk [vmem:[#allocation2] sm:$0x1] %vm305, %v304
        // Predicated region
        $region41: #{tpu_custom_call.1} parent=31 // pred_check
          %p307 = pneg %p249
        $region42: #{tpu_custom_call.1} parent=31 // pred_check_branch
          %309 = sbr.rel (%p307) target = $region44
        $region43: #{tpu_custom_call.1} parent=31 // pred_region
          %v310 = vld [vmem:[%s247] sm:$0x1]
          %v311 = vld [vmem:[#allocation2] sm:$0x1]
          %v312 = vmul.f32 %v311, 0.00390625
          %v313 = vlog2.pop %v312
          %v314 = vmul.f32 %v313, 0.6931472
          %v315 = vmul.f32 %v314, %v310
          %v316 = vmul.f32 %v315, 1.442695
          %v317 = vpow.pop %v316
          %318 = vst.msk [vmem:[%s240] sm:$0x1] %vm305, %v317
        $region44: #{tpu_custom_call.1} parent=31 // pred_fallthru
          _
        %s319 = sand.u32 %s131, 1
        %s320 = scalar_lea.sflag [#allocation5], %s319
        %s321 = sand.u32 %s131, 1
        %s322 = scalar_lea.vmem [#allocation6], %s321
        // Predicated region
        $region45: #{tpu_custom_call.1} parent=31 // pred_check
          %p323 = pneg %p141
        $region46: #{tpu_custom_call.1} parent=31 // pred_check_branch
          %325 = sbr.rel (%p323) target = $region48
        $region47: #{tpu_custom_call.1} parent=31 // pred_region
          %327 = vsyncadd %s320, 0
          %s328 = sadd.s32 %s26, %s25
          %s329 = scalar_lea.hbm %s3, %s328
          %s331 = sshll.u32 %s322, 4
          %s332 = int_to_ptr.vmem [resolvable:$true] %s331
          %s333 = sshll.u32 %s329, 4
          %s334 = int_to_ptr.hbm [resolvable:$true] %s333
          %336 = dma.vmem_to_hbm [thread:$0]  %s332, 16, %s334, %s320
        $region48: #{tpu_custom_call.1} parent=31 // pred_fallthru
          _
      $region32: #{tpu_custom_call.1} parent=5 // pred_fallthru
        _
      %p337 = scmp.le.s32.totalorder 2, %s15
      // Predicated region
      $region49: #{tpu_custom_call.1} parent=5 // pred_check
        %p338 = pneg %p337
      $region50: #{tpu_custom_call.1} parent=5 // pred_check_branch
        %340 = sbr.rel (%p338) target = $region52
      $region51: #{tpu_custom_call.1} parent=5 // pred_region
        %s341 = ssub.s32 %s15, 2
        // Predicated region
        $region53: #{tpu_custom_call.1} parent=51 // pred_check
          %p342 = pneg %p147
        $region54: #{tpu_custom_call.1} parent=51 // pred_check_branch
          %344 = sbr.rel (%p342) target = $region56
        $region55: #{tpu_custom_call.1} parent=51 // pred_region
          %s345 = sand.u32 %s132, 1
          %s346 = scalar_lea.sflag [#allocation5], %s345
          %s347 = sand.u32 %s132, 1
          %s348 = scalar_lea.vmem [#allocation6], %s347
          %350 = dma.done %s346, 16
        $region56: #{tpu_custom_call.1} parent=51 // pred_fallthru
          _
      $region52: #{tpu_custom_call.1} parent=5 // pred_fallthru
        _
    $region6: #{tpu_custom_call.1} parent=1 // loop_footer
      %s19 = sadd.s32 1, %s15
    $region7: #{tpu_custom_call.1} parent=1 // loop_footer_branch
      %14 = sbr.rel target = $region3
    $region8: #{tpu_custom_call.1} parent=1 // loop_exit
      _
    %351 = vsyncpa [#allocation4], 1
    %s352 = scalar_lea.sflag [#allocation4], 1
    %353 = vsyncpa %s352, 1
    %354 = vsyncpa [#allocation5], 1
    %s355 = scalar_lea.sflag [#allocation5], 1
    %356 = vsyncpa %s355, 1

</llo_original>
